<compile_context>
chip_gen: v7x
topology: tpu7x:2x2x1
jax: 0.10.0
libtpu: 0.0.40
codegen_flags: <defaults>
</compile_context>

<pallas_src>
import math

import jax
import jax.numpy as jnp
from jax.experimental import pallas as pl
from jax.experimental.pallas import tpu as pltpu


# ---------------------------------------------------------------------------
# Mish variants
# ---------------------------------------------------------------------------
def _mish_exact(x):
    # Reference mish(x) = x * tanh(softplus(x)); overflow-safe softplus (f32).
    sp = jnp.where(x > 20.0, x, jnp.log1p(jnp.exp(jnp.minimum(x, 20.0))))
    return x * jnp.tanh(sp)


def _mish_fast(x):
    # mish(x) = x * tanh(log(1 + e^x)) = x * (1 - 2 / ((1 + e^x)^2 + 1))
    # One EUP exp + one approx EUP reciprocal (both off the VALU critical path).
    # Clamp at 30 removes the inf path entirely: for x > 30 the correction term
    # is < 1e-26, so mish(x) == x to f32 precision either way.
    e = jnp.exp(jnp.minimum(x, 30.0))
    t = 1.0 + e
    return x * (1.0 - 2.0 * pl.reciprocal(t * t + 1.0, approx=True))


# ---------------------------------------------------------------------------
# Fused Pallas kernel: HBM pe-row gather + Linear -> Mish -> Linear
# ---------------------------------------------------------------------------
def timestep_embed_kernel(ts_ref, pe_hbm, w1_ref, b1_ref, w2_ref, b2_ref,
                          out_ref, x_scratch, sem):
    B, D = out_ref.shape
    max_len = pe_hbm.shape[0]

    # Gather exactly the B needed rows of the sinusoidal table straight from
    # HBM into their destination sublanes: issue all B row-DMAs, then wait.
    copies = []
    for i in range(B):                                    # B small & static -> unrolled
        t = jnp.clip(ts_ref[i], 0, max_len - 1)           # scalar clamp: no OOB DMA
        cp = pltpu.make_async_copy(
            pe_hbm.at[pl.ds(t, 1), :],                    # [1, D] row in HBM
            x_scratch.at[pl.ds(i, 1), :],                 # lands at row i in VMEM
            sem.at[i])
        cp.start()
        copies.append(cp)
    for cp in copies:
        cp.wait()

    x = x_scratch[...].astype(jnp.bfloat16)               # [B, D]

    # Linear 1 (bf16 operands, f32 accumulation) + Mish
    h = jnp.dot(x, w1_ref[...], preferred_element_type=jnp.float32) + b1_ref[...]
    h = _mish_fast(h)

    # Linear 2
    y = jnp.dot(h.astype(jnp.bfloat16), w2_ref[...],
                preferred_element_type=jnp.float32) + b2_ref[...]
    out_ref[...] = y.astype(out_ref.dtype)


def timestep_embedder(timesteps, pe, w1, b1, w2, b2):
    """Fused TimestepEmbedder forward.

    timesteps: int32 [B]; pe: [max_len, 1, D] (or [max_len, D]);
    w1, w2: [D, D] stored (in, out); b1, b2: [D].
    Returns f32 [B, D].
    """
    pe2d = pe[:, 0, :] if pe.ndim == 3 else pe             # [max_len, D]
    max_len, D = pe2d.shape
    B = timesteps.shape[0]

    vmem = pl.BlockSpec(memory_space=pltpu.MemorySpace.VMEM)
    grid_spec = pltpu.PrefetchScalarGridSpec(
        num_scalar_prefetch=1,           # timesteps -> SMEM, first kernel ref
        grid=(),                         # single invocation, single TensorCore
        in_specs=[
            pl.BlockSpec(memory_space=pl.ANY),   # pe stays in HBM; rows DMA'd in-kernel
            vmem, vmem, vmem, vmem,              # w1, b1, w2, b2
        ],
        out_specs=vmem,
        scratch_shapes=[
            pltpu.VMEM((B, D), pe2d.dtype),      # gathered rows
            pltpu.SemaphoreType.DMA((B,)),       # one DMA sem per row copy
        ],
    )

    # Advisory cost: two tiny matmuls + exp/recip; only a few KB actually moved.
    bytes_accessed = (B * 4                # timesteps
                      + B * D * 4          # gathered pe rows (f32)
                      + 2 * D * D * 2      # bf16 weights
                      + 2 * D * 4          # biases
                      + B * D * 4)         # output
    cost = pl.CostEstimate(flops=4 * B * D * D,
                           transcendentals=2 * B * D,
                           bytes_accessed=bytes_accessed)

    return pl.pallas_call(
        timestep_embed_kernel,
        out_shape=jax.ShapeDtypeStruct((B, D), pe2d.dtype),
        grid_spec=grid_spec,
        cost_estimate=cost,
    )(
        timesteps.astype(jnp.int32),
        pe2d,
        w1.astype(jnp.bfloat16), b1.reshape(1, D).astype(jnp.float32),
        w2.astype(jnp.bfloat16), b2.reshape(1, D).astype(jnp.float32),
    )


# ---------------------------------------------------------------------------
# Recommended default when the call site allows it: the output depends only on
# the integer timestep, so fold the whole MLP into a [max_len, D] lookup table
# once; the per-step hot path becomes a 4 KB gather (no Pallas call, no MXU).
# ---------------------------------------------------------------------------
def precompute_time_embed_table(pe, w1, b1, w2, b2):
    x = pe[:, 0, :] if pe.ndim == 3 else pe                # [max_len, D]
    h = x @ w1 + b1
    h = _mish_exact(h)
    return h @ w2 + b2                                     # [max_len, D]


def timestep_embedder_from_table(timesteps, table):
    return table[timesteps]                                # [B, D]


# ---------------------------------------------------------------------------
# Helpers / reference
# ---------------------------------------------------------------------------
def make_sinusoidal_pe(max_len, d_model):
    """Standard PositionalEncoding buffer: shape [max_len, 1, d_model]."""
    position = jnp.arange(max_len, dtype=jnp.float32)[:, None]
    div_term = jnp.exp(
        jnp.arange(0, d_model, 2, dtype=jnp.float32) * (-math.log(10000.0) / d_model)
    )
    pe = jnp.zeros((max_len, d_model), dtype=jnp.float32)
    pe = pe.at[:, 0::2].set(jnp.sin(position * div_term))
    pe = pe.at[:, 1::2].set(jnp.cos(position * div_term))
    return pe[:, None, :]


def reference_forward(timesteps, pe, w1, b1, w2, b2):
    emb = pe[timesteps]                  # [B, 1, D]
    h = emb @ w1 + b1
    h = _mish_exact(h)
    y = h @ w2 + b2
    return jnp.squeeze(y, axis=1)        # [B, D]


if __name__ == "__main__":
    latent_dim = 128          # D (time_embed_dim == latent_dim)
    batch = 8                 # number of timesteps
    max_len = 1000

    key = jax.random.PRNGKey(0)
    k_ts, k_w1, k_b1, k_w2, k_b2 = jax.random.split(key, 5)

    timesteps = jax.random.randint(k_ts, (batch,), 0, max_len, dtype=jnp.int32)
    pe = make_sinusoidal_pe(max_len, latent_dim)

    # Deterministic synthetic Linear params (stored as [in, out]).
    scale = 1.0 / math.sqrt(latent_dim)
    w1 = jax.random.uniform(k_w1, (latent_dim, latent_dim), jnp.float32, -scale, scale)
    b1 = jax.random.uniform(k_b1, (latent_dim,), jnp.float32, -scale, scale)
    w2 = jax.random.uniform(k_w2, (latent_dim, latent_dim), jnp.float32, -scale, scale)
    b2 = jax.random.uniform(k_b2, (latent_dim,), jnp.float32, -scale, scale)

    ref = reference_forward(timesteps, pe, w1, b1, w2, b2)

    # Fused Pallas kernel (bf16 MXU operands + approx recip -> relaxed tolerance).
    out = timestep_embedder(timesteps, pe, w1, b1, w2, b2)
    out = jax.block_until_ready(out)
    assert out.shape == (batch, latent_dim)
    assert jnp.allclose(out, ref, atol=3e-2, rtol=0.0), "fused kernel mismatch vs. reference"

    # Precomputed-table path (exact f32; preferred default when call site allows).
    table = precompute_time_embed_table(pe, w1, b1, w2, b2)
    out_tab = jax.block_until_ready(timestep_embedder_from_table(timesteps, table))
    assert jnp.allclose(out_tab, ref, atol=1e-5, rtol=1e-5), "table path mismatch vs. reference"

    print("KERNEL_OK")
</pallas_src>

<mosaic_0001>
module attributes {stable_mosaic.version = 11 : i64} {
  func.func @timestep_embed_kernel(%arg0: memref<8xi32, #tpu.memory_space<smem>>, %arg1: memref<1000x128xf32, #tpu.memory_space<any>>, %arg2: memref<128x128xbf16, #tpu.memory_space<vmem>>, %arg3: memref<1x128xf32, #tpu.memory_space<vmem>>, %arg4: memref<128x128xbf16, #tpu.memory_space<vmem>>, %arg5: memref<1x128xf32, #tpu.memory_space<vmem>>, %arg6: memref<8x128xf32, #tpu.memory_space<vmem>>, %arg7: memref<8x128xf32, #tpu.memory_space<vmem>>, %arg8: memref<8x!tpu.dma_semaphore, #tpu.memory_space<semaphore_mem>>) attributes {dimension_semantics = [], scalar_prefetch = 1 : i64, scratch_operands = 2 : i64, tpu.core_type = #tpu.core_type<tc>} {
    %c0 = arith.constant 0 : index
    %0 = memref.load %arg0[%c0] : memref<8xi32, #tpu.memory_space<smem>>
    %c0_i32 = arith.constant 0 : i32
    %c999_i32 = arith.constant 999 : i32
    %1 = arith.maxsi %c0_i32, %0 : i32
    %2 = arith.minsi %c999_i32, %1 : i32
    %c0_i32_0 = arith.constant 0 : i32
    %c0_i32_1 = arith.constant 0 : i32
    %3 = tpu.memref_slice %arg1[%2, %c0_i32_1] : memref<1000x128xf32, #tpu.memory_space<any>> -> memref<1x128xf32, #tpu.memory_space<any>>
    %c0_i32_2 = arith.constant 0 : i32
    %c0_i32_3 = arith.constant 0 : i32
    %4 = tpu.memref_slice %arg7[%c0_i32_2, %c0_i32_3] : memref<8x128xf32, #tpu.memory_space<vmem>> -> memref<1x128xf32, #tpu.memory_space<vmem>>
    %5 = tpu.memref_slice %arg8[%c0_i32_0] : memref<8x!tpu.dma_semaphore, #tpu.memory_space<semaphore_mem>> -> memref<1x!tpu.dma_semaphore, #tpu.memory_space<semaphore_mem>>
    %6 = tpu.memref_squeeze %5 : memref<1x!tpu.dma_semaphore, #tpu.memory_space<semaphore_mem>> -> memref<!tpu.dma_semaphore, #tpu.memory_space<semaphore_mem>>
    tpu.enqueue_dma source(%3 : memref<1x128xf32, #tpu.memory_space<any>>) target(%4 : memref<1x128xf32, #tpu.memory_space<vmem>>) target_semaphore(%6 : memref<!tpu.dma_semaphore, #tpu.memory_space<semaphore_mem>>)
    %c1 = arith.constant 1 : index
    %7 = memref.load %arg0[%c1] : memref<8xi32, #tpu.memory_space<smem>>
    %c0_i32_4 = arith.constant 0 : i32
    %c999_i32_5 = arith.constant 999 : i32
    %8 = arith.maxsi %c0_i32_4, %7 : i32
    %9 = arith.minsi %c999_i32_5, %8 : i32
    %c1_i32 = arith.constant 1 : i32
    %c0_i32_6 = arith.constant 0 : i32
    %10 = tpu.memref_slice %arg1[%9, %c0_i32_6] : memref<1000x128xf32, #tpu.memory_space<any>> -> memref<1x128xf32, #tpu.memory_space<any>>
    %c1_i32_7 = arith.constant 1 : i32
    %c0_i32_8 = arith.constant 0 : i32
    %11 = tpu.memref_slice %arg7[%c1_i32_7, %c0_i32_8] : memref<8x128xf32, #tpu.memory_space<vmem>> -> memref<1x128xf32, #tpu.memory_space<vmem>>
    %12 = tpu.memref_slice %arg8[%c1_i32] : memref<8x!tpu.dma_semaphore, #tpu.memory_space<semaphore_mem>> -> memref<1x!tpu.dma_semaphore, #tpu.memory_space<semaphore_mem>>
    %13 = tpu.memref_squeeze %12 : memref<1x!tpu.dma_semaphore, #tpu.memory_space<semaphore_mem>> -> memref<!tpu.dma_semaphore, #tpu.memory_space<semaphore_mem>>
    tpu.enqueue_dma source(%10 : memref<1x128xf32, #tpu.memory_space<any>>) target(%11 : memref<1x128xf32, #tpu.memory_space<vmem>>) target_semaphore(%13 : memref<!tpu.dma_semaphore, #tpu.memory_space<semaphore_mem>>)
    %c2 = arith.constant 2 : index
    %14 = memref.load %arg0[%c2] : memref<8xi32, #tpu.memory_space<smem>>
    %c0_i32_9 = arith.constant 0 : i32
    %c999_i32_10 = arith.constant 999 : i32
    %15 = arith.maxsi %c0_i32_9, %14 : i32
    %16 = arith.minsi %c999_i32_10, %15 : i32
    %c2_i32 = arith.constant 2 : i32
    %c0_i32_11 = arith.constant 0 : i32
    %17 = tpu.memref_slice %arg1[%16, %c0_i32_11] : memref<1000x128xf32, #tpu.memory_space<any>> -> memref<1x128xf32, #tpu.memory_space<any>>
    %c2_i32_12 = arith.constant 2 : i32
    %c0_i32_13 = arith.constant 0 : i32
    %18 = tpu.memref_slice %arg7[%c2_i32_12, %c0_i32_13] : memref<8x128xf32, #tpu.memory_space<vmem>> -> memref<1x128xf32, #tpu.memory_space<vmem>>
    %19 = tpu.memref_slice %arg8[%c2_i32] : memref<8x!tpu.dma_semaphore, #tpu.memory_space<semaphore_mem>> -> memref<1x!tpu.dma_semaphore, #tpu.memory_space<semaphore_mem>>
    %20 = tpu.memref_squeeze %19 : memref<1x!tpu.dma_semaphore, #tpu.memory_space<semaphore_mem>> -> memref<!tpu.dma_semaphore, #tpu.memory_space<semaphore_mem>>
    tpu.enqueue_dma source(%17 : memref<1x128xf32, #tpu.memory_space<any>>) target(%18 : memref<1x128xf32, #tpu.memory_space<vmem>>) target_semaphore(%20 : memref<!tpu.dma_semaphore, #tpu.memory_space<semaphore_mem>>)
    %c3 = arith.constant 3 : index
    %21 = memref.load %arg0[%c3] : memref<8xi32, #tpu.memory_space<smem>>
    %c0_i32_14 = arith.constant 0 : i32
    %c999_i32_15 = arith.constant 999 : i32
    %22 = arith.maxsi %c0_i32_14, %21 : i32
    %23 = arith.minsi %c999_i32_15, %22 : i32
    %c3_i32 = arith.constant 3 : i32
    %c0_i32_16 = arith.constant 0 : i32
    %24 = tpu.memref_slice %arg1[%23, %c0_i32_16] : memref<1000x128xf32, #tpu.memory_space<any>> -> memref<1x128xf32, #tpu.memory_space<any>>
    %c3_i32_17 = arith.constant 3 : i32
    %c0_i32_18 = arith.constant 0 : i32
    %25 = tpu.memref_slice %arg7[%c3_i32_17, %c0_i32_18] : memref<8x128xf32, #tpu.memory_space<vmem>> -> memref<1x128xf32, #tpu.memory_space<vmem>>
    %26 = tpu.memref_slice %arg8[%c3_i32] : memref<8x!tpu.dma_semaphore, #tpu.memory_space<semaphore_mem>> -> memref<1x!tpu.dma_semaphore, #tpu.memory_space<semaphore_mem>>
    %27 = tpu.memref_squeeze %26 : memref<1x!tpu.dma_semaphore, #tpu.memory_space<semaphore_mem>> -> memref<!tpu.dma_semaphore, #tpu.memory_space<semaphore_mem>>
    tpu.enqueue_dma source(%24 : memref<1x128xf32, #tpu.memory_space<any>>) target(%25 : memref<1x128xf32, #tpu.memory_space<vmem>>) target_semaphore(%27 : memref<!tpu.dma_semaphore, #tpu.memory_space<semaphore_mem>>)
    %c4 = arith.constant 4 : index
    %28 = memref.load %arg0[%c4] : memref<8xi32, #tpu.memory_space<smem>>
    %c0_i32_19 = arith.constant 0 : i32
    %c999_i32_20 = arith.constant 999 : i32
    %29 = arith.maxsi %c0_i32_19, %28 : i32
    %30 = arith.minsi %c999_i32_20, %29 : i32
    %c4_i32 = arith.constant 4 : i32
    %c0_i32_21 = arith.constant 0 : i32
    %31 = tpu.memref_slice %arg1[%30, %c0_i32_21] : memref<1000x128xf32, #tpu.memory_space<any>> -> memref<1x128xf32, #tpu.memory_space<any>>
    %c4_i32_22 = arith.constant 4 : i32
    %c0_i32_23 = arith.constant 0 : i32
    %32 = tpu.memref_slice %arg7[%c4_i32_22, %c0_i32_23] : memref<8x128xf32, #tpu.memory_space<vmem>> -> memref<1x128xf32, #tpu.memory_space<vmem>>
    %33 = tpu.memref_slice %arg8[%c4_i32] : memref<8x!tpu.dma_semaphore, #tpu.memory_space<semaphore_mem>> -> memref<1x!tpu.dma_semaphore, #tpu.memory_space<semaphore_mem>>
    %34 = tpu.memref_squeeze %33 : memref<1x!tpu.dma_semaphore, #tpu.memory_space<semaphore_mem>> -> memref<!tpu.dma_semaphore, #tpu.memory_space<semaphore_mem>>
    tpu.enqueue_dma source(%31 : memref<1x128xf32, #tpu.memory_space<any>>) target(%32 : memref<1x128xf32, #tpu.memory_space<vmem>>) target_semaphore(%34 : memref<!tpu.dma_semaphore, #tpu.memory_space<semaphore_mem>>)
    %c5 = arith.constant 5 : index
    %35 = memref.load %arg0[%c5] : memref<8xi32, #tpu.memory_space<smem>>
    %c0_i32_24 = arith.constant 0 : i32
    %c999_i32_25 = arith.constant 999 : i32
    %36 = arith.maxsi %c0_i32_24, %35 : i32
    %37 = arith.minsi %c999_i32_25, %36 : i32
    %c5_i32 = arith.constant 5 : i32
    %c0_i32_26 = arith.constant 0 : i32
    %38 = tpu.memref_slice %arg1[%37, %c0_i32_26] : memref<1000x128xf32, #tpu.memory_space<any>> -> memref<1x128xf32, #tpu.memory_space<any>>
    %c5_i32_27 = arith.constant 5 : i32
    %c0_i32_28 = arith.constant 0 : i32
    %39 = tpu.memref_slice %arg7[%c5_i32_27, %c0_i32_28] : memref<8x128xf32, #tpu.memory_space<vmem>> -> memref<1x128xf32, #tpu.memory_space<vmem>>
    %40 = tpu.memref_slice %arg8[%c5_i32] : memref<8x!tpu.dma_semaphore, #tpu.memory_space<semaphore_mem>> -> memref<1x!tpu.dma_semaphore, #tpu.memory_space<semaphore_mem>>
    %41 = tpu.memref_squeeze %40 : memref<1x!tpu.dma_semaphore, #tpu.memory_space<semaphore_mem>> -> memref<!tpu.dma_semaphore, #tpu.memory_space<semaphore_mem>>
    tpu.enqueue_dma source(%38 : memref<1x128xf32, #tpu.memory_space<any>>) target(%39 : memref<1x128xf32, #tpu.memory_space<vmem>>) target_semaphore(%41 : memref<!tpu.dma_semaphore, #tpu.memory_space<semaphore_mem>>)
    %c6 = arith.constant 6 : index
    %42 = memref.load %arg0[%c6] : memref<8xi32, #tpu.memory_space<smem>>
    %c0_i32_29 = arith.constant 0 : i32
    %c999_i32_30 = arith.constant 999 : i32
    %43 = arith.maxsi %c0_i32_29, %42 : i32
    %44 = arith.minsi %c999_i32_30, %43 : i32
    %c6_i32 = arith.constant 6 : i32
    %c0_i32_31 = arith.constant 0 : i32
    %45 = tpu.memref_slice %arg1[%44, %c0_i32_31] : memref<1000x128xf32, #tpu.memory_space<any>> -> memref<1x128xf32, #tpu.memory_space<any>>
    %c6_i32_32 = arith.constant 6 : i32
    %c0_i32_33 = arith.constant 0 : i32
    %46 = tpu.memref_slice %arg7[%c6_i32_32, %c0_i32_33] : memref<8x128xf32, #tpu.memory_space<vmem>> -> memref<1x128xf32, #tpu.memory_space<vmem>>
    %47 = tpu.memref_slice %arg8[%c6_i32] : memref<8x!tpu.dma_semaphore, #tpu.memory_space<semaphore_mem>> -> memref<1x!tpu.dma_semaphore, #tpu.memory_space<semaphore_mem>>
    %48 = tpu.memref_squeeze %47 : memref<1x!tpu.dma_semaphore, #tpu.memory_space<semaphore_mem>> -> memref<!tpu.dma_semaphore, #tpu.memory_space<semaphore_mem>>
    tpu.enqueue_dma source(%45 : memref<1x128xf32, #tpu.memory_space<any>>) target(%46 : memref<1x128xf32, #tpu.memory_space<vmem>>) target_semaphore(%48 : memref<!tpu.dma_semaphore, #tpu.memory_space<semaphore_mem>>)
    %c7 = arith.constant 7 : index
    %49 = memref.load %arg0[%c7] : memref<8xi32, #tpu.memory_space<smem>>
    %c0_i32_34 = arith.constant 0 : i32
    %c999_i32_35 = arith.constant 999 : i32
    %50 = arith.maxsi %c0_i32_34, %49 : i32
    %51 = arith.minsi %c999_i32_35, %50 : i32
    %c7_i32 = arith.constant 7 : i32
    %c0_i32_36 = arith.constant 0 : i32
    %52 = tpu.memref_slice %arg1[%51, %c0_i32_36] : memref<1000x128xf32, #tpu.memory_space<any>> -> memref<1x128xf32, #tpu.memory_space<any>>
    %c7_i32_37 = arith.constant 7 : i32
    %c0_i32_38 = arith.constant 0 : i32
    %53 = tpu.memref_slice %arg7[%c7_i32_37, %c0_i32_38] : memref<8x128xf32, #tpu.memory_space<vmem>> -> memref<1x128xf32, #tpu.memory_space<vmem>>
    %54 = tpu.memref_slice %arg8[%c7_i32] : memref<8x!tpu.dma_semaphore, #tpu.memory_space<semaphore_mem>> -> memref<1x!tpu.dma_semaphore, #tpu.memory_space<semaphore_mem>>
    %55 = tpu.memref_squeeze %54 : memref<1x!tpu.dma_semaphore, #tpu.memory_space<semaphore_mem>> -> memref<!tpu.dma_semaphore, #tpu.memory_space<semaphore_mem>>
    tpu.enqueue_dma source(%52 : memref<1x128xf32, #tpu.memory_space<any>>) target(%53 : memref<1x128xf32, #tpu.memory_space<vmem>>) target_semaphore(%55 : memref<!tpu.dma_semaphore, #tpu.memory_space<semaphore_mem>>)
    %c0_i32_39 = arith.constant 0 : i32
    %c0_i32_40 = arith.constant 0 : i32
    %56 = tpu.memref_slice %arg1[%2, %c0_i32_40] : memref<1000x128xf32, #tpu.memory_space<any>> -> memref<1x128xf32, #tpu.memory_space<any>>
    %c0_i32_41 = arith.constant 0 : i32
    %c0_i32_42 = arith.constant 0 : i32
    %57 = tpu.memref_slice %arg7[%c0_i32_41, %c0_i32_42] : memref<8x128xf32, #tpu.memory_space<vmem>> -> memref<1x128xf32, #tpu.memory_space<vmem>>
    %58 = tpu.memref_slice %arg8[%c0_i32_39] : memref<8x!tpu.dma_semaphore, #tpu.memory_space<semaphore_mem>> -> memref<1x!tpu.dma_semaphore, #tpu.memory_space<semaphore_mem>>
    %59 = tpu.memref_squeeze %58 : memref<1x!tpu.dma_semaphore, #tpu.memory_space<semaphore_mem>> -> memref<!tpu.dma_semaphore, #tpu.memory_space<semaphore_mem>>
    tpu.wait_dma2 semaphore(%59 : memref<!tpu.dma_semaphore, #tpu.memory_space<semaphore_mem>>) src(%56 : memref<1x128xf32, #tpu.memory_space<any>>) dst(%57 : memref<1x128xf32, #tpu.memory_space<vmem>>)
    %c1_i32_43 = arith.constant 1 : i32
    %c0_i32_44 = arith.constant 0 : i32
    %60 = tpu.memref_slice %arg1[%9, %c0_i32_44] : memref<1000x128xf32, #tpu.memory_space<any>> -> memref<1x128xf32, #tpu.memory_space<any>>
    %c1_i32_45 = arith.constant 1 : i32
    %c0_i32_46 = arith.constant 0 : i32
    %61 = tpu.memref_slice %arg7[%c1_i32_45, %c0_i32_46] : memref<8x128xf32, #tpu.memory_space<vmem>> -> memref<1x128xf32, #tpu.memory_space<vmem>>
    %62 = tpu.memref_slice %arg8[%c1_i32_43] : memref<8x!tpu.dma_semaphore, #tpu.memory_space<semaphore_mem>> -> memref<1x!tpu.dma_semaphore, #tpu.memory_space<semaphore_mem>>
    %63 = tpu.memref_squeeze %62 : memref<1x!tpu.dma_semaphore, #tpu.memory_space<semaphore_mem>> -> memref<!tpu.dma_semaphore, #tpu.memory_space<semaphore_mem>>
    tpu.wait_dma2 semaphore(%63 : memref<!tpu.dma_semaphore, #tpu.memory_space<semaphore_mem>>) src(%60 : memref<1x128xf32, #tpu.memory_space<any>>) dst(%61 : memref<1x128xf32, #tpu.memory_space<vmem>>)
    %c2_i32_47 = arith.constant 2 : i32
    %c0_i32_48 = arith.constant 0 : i32
    %64 = tpu.memref_slice %arg1[%16, %c0_i32_48] : memref<1000x128xf32, #tpu.memory_space<any>> -> memref<1x128xf32, #tpu.memory_space<any>>
    %c2_i32_49 = arith.constant 2 : i32
    %c0_i32_50 = arith.constant 0 : i32
    %65 = tpu.memref_slice %arg7[%c2_i32_49, %c0_i32_50] : memref<8x128xf32, #tpu.memory_space<vmem>> -> memref<1x128xf32, #tpu.memory_space<vmem>>
    %66 = tpu.memref_slice %arg8[%c2_i32_47] : memref<8x!tpu.dma_semaphore, #tpu.memory_space<semaphore_mem>> -> memref<1x!tpu.dma_semaphore, #tpu.memory_space<semaphore_mem>>
    %67 = tpu.memref_squeeze %66 : memref<1x!tpu.dma_semaphore, #tpu.memory_space<semaphore_mem>> -> memref<!tpu.dma_semaphore, #tpu.memory_space<semaphore_mem>>
    tpu.wait_dma2 semaphore(%67 : memref<!tpu.dma_semaphore, #tpu.memory_space<semaphore_mem>>) src(%64 : memref<1x128xf32, #tpu.memory_space<any>>) dst(%65 : memref<1x128xf32, #tpu.memory_space<vmem>>)
    %c3_i32_51 = arith.constant 3 : i32
    %c0_i32_52 = arith.constant 0 : i32
    %68 = tpu.memref_slice %arg1[%23, %c0_i32_52] : memref<1000x128xf32, #tpu.memory_space<any>> -> memref<1x128xf32, #tpu.memory_space<any>>
    %c3_i32_53 = arith.constant 3 : i32
    %c0_i32_54 = arith.constant 0 : i32
    %69 = tpu.memref_slice %arg7[%c3_i32_53, %c0_i32_54] : memref<8x128xf32, #tpu.memory_space<vmem>> -> memref<1x128xf32, #tpu.memory_space<vmem>>
    %70 = tpu.memref_slice %arg8[%c3_i32_51] : memref<8x!tpu.dma_semaphore, #tpu.memory_space<semaphore_mem>> -> memref<1x!tpu.dma_semaphore, #tpu.memory_space<semaphore_mem>>
    %71 = tpu.memref_squeeze %70 : memref<1x!tpu.dma_semaphore, #tpu.memory_space<semaphore_mem>> -> memref<!tpu.dma_semaphore, #tpu.memory_space<semaphore_mem>>
    tpu.wait_dma2 semaphore(%71 : memref<!tpu.dma_semaphore, #tpu.memory_space<semaphore_mem>>) src(%68 : memref<1x128xf32, #tpu.memory_space<any>>) dst(%69 : memref<1x128xf32, #tpu.memory_space<vmem>>)
    %c4_i32_55 = arith.constant 4 : i32
    %c0_i32_56 = arith.constant 0 : i32
    %72 = tpu.memref_slice %arg1[%30, %c0_i32_56] : memref<1000x128xf32, #tpu.memory_space<any>> -> memref<1x128xf32, #tpu.memory_space<any>>
    %c4_i32_57 = arith.constant 4 : i32
    %c0_i32_58 = arith.constant 0 : i32
    %73 = tpu.memref_slice %arg7[%c4_i32_57, %c0_i32_58] : memref<8x128xf32, #tpu.memory_space<vmem>> -> memref<1x128xf32, #tpu.memory_space<vmem>>
    %74 = tpu.memref_slice %arg8[%c4_i32_55] : memref<8x!tpu.dma_semaphore, #tpu.memory_space<semaphore_mem>> -> memref<1x!tpu.dma_semaphore, #tpu.memory_space<semaphore_mem>>
    %75 = tpu.memref_squeeze %74 : memref<1x!tpu.dma_semaphore, #tpu.memory_space<semaphore_mem>> -> memref<!tpu.dma_semaphore, #tpu.memory_space<semaphore_mem>>
    tpu.wait_dma2 semaphore(%75 : memref<!tpu.dma_semaphore, #tpu.memory_space<semaphore_mem>>) src(%72 : memref<1x128xf32, #tpu.memory_space<any>>) dst(%73 : memref<1x128xf32, #tpu.memory_space<vmem>>)
    %c5_i32_59 = arith.constant 5 : i32
    %c0_i32_60 = arith.constant 0 : i32
    %76 = tpu.memref_slice %arg1[%37, %c0_i32_60] : memref<1000x128xf32, #tpu.memory_space<any>> -> memref<1x128xf32, #tpu.memory_space<any>>
    %c5_i32_61 = arith.constant 5 : i32
    %c0_i32_62 = arith.constant 0 : i32
    %77 = tpu.memref_slice %arg7[%c5_i32_61, %c0_i32_62] : memref<8x128xf32, #tpu.memory_space<vmem>> -> memref<1x128xf32, #tpu.memory_space<vmem>>
    %78 = tpu.memref_slice %arg8[%c5_i32_59] : memref<8x!tpu.dma_semaphore, #tpu.memory_space<semaphore_mem>> -> memref<1x!tpu.dma_semaphore, #tpu.memory_space<semaphore_mem>>
    %79 = tpu.memref_squeeze %78 : memref<1x!tpu.dma_semaphore, #tpu.memory_space<semaphore_mem>> -> memref<!tpu.dma_semaphore, #tpu.memory_space<semaphore_mem>>
    tpu.wait_dma2 semaphore(%79 : memref<!tpu.dma_semaphore, #tpu.memory_space<semaphore_mem>>) src(%76 : memref<1x128xf32, #tpu.memory_space<any>>) dst(%77 : memref<1x128xf32, #tpu.memory_space<vmem>>)
    %c6_i32_63 = arith.constant 6 : i32
    %c0_i32_64 = arith.constant 0 : i32
    %80 = tpu.memref_slice %arg1[%44, %c0_i32_64] : memref<1000x128xf32, #tpu.memory_space<any>> -> memref<1x128xf32, #tpu.memory_space<any>>
    %c6_i32_65 = arith.constant 6 : i32
    %c0_i32_66 = arith.constant 0 : i32
    %81 = tpu.memref_slice %arg7[%c6_i32_65, %c0_i32_66] : memref<8x128xf32, #tpu.memory_space<vmem>> -> memref<1x128xf32, #tpu.memory_space<vmem>>
    %82 = tpu.memref_slice %arg8[%c6_i32_63] : memref<8x!tpu.dma_semaphore, #tpu.memory_space<semaphore_mem>> -> memref<1x!tpu.dma_semaphore, #tpu.memory_space<semaphore_mem>>
    %83 = tpu.memref_squeeze %82 : memref<1x!tpu.dma_semaphore, #tpu.memory_space<semaphore_mem>> -> memref<!tpu.dma_semaphore, #tpu.memory_space<semaphore_mem>>
    tpu.wait_dma2 semaphore(%83 : memref<!tpu.dma_semaphore, #tpu.memory_space<semaphore_mem>>) src(%80 : memref<1x128xf32, #tpu.memory_space<any>>) dst(%81 : memref<1x128xf32, #tpu.memory_space<vmem>>)
    %c7_i32_67 = arith.constant 7 : i32
    %c0_i32_68 = arith.constant 0 : i32
    %84 = tpu.memref_slice %arg1[%51, %c0_i32_68] : memref<1000x128xf32, #tpu.memory_space<any>> -> memref<1x128xf32, #tpu.memory_space<any>>
    %c7_i32_69 = arith.constant 7 : i32
    %c0_i32_70 = arith.constant 0 : i32
    %85 = tpu.memref_slice %arg7[%c7_i32_69, %c0_i32_70] : memref<8x128xf32, #tpu.memory_space<vmem>> -> memref<1x128xf32, #tpu.memory_space<vmem>>
    %86 = tpu.memref_slice %arg8[%c7_i32_67] : memref<8x!tpu.dma_semaphore, #tpu.memory_space<semaphore_mem>> -> memref<1x!tpu.dma_semaphore, #tpu.memory_space<semaphore_mem>>
    %87 = tpu.memref_squeeze %86 : memref<1x!tpu.dma_semaphore, #tpu.memory_space<semaphore_mem>> -> memref<!tpu.dma_semaphore, #tpu.memory_space<semaphore_mem>>
    tpu.wait_dma2 semaphore(%87 : memref<!tpu.dma_semaphore, #tpu.memory_space<semaphore_mem>>) src(%84 : memref<1x128xf32, #tpu.memory_space<any>>) dst(%85 : memref<1x128xf32, #tpu.memory_space<vmem>>)
    %c0_71 = arith.constant 0 : index
    %c0_72 = arith.constant 0 : index
    %88 = vector.load %arg7[%c0_71, %c0_72] : memref<8x128xf32, #tpu.memory_space<vmem>>, vector<8x128xf32>
    %89 = arith.truncf %88 : vector<8x128xf32> to vector<8x128xbf16>
    %c0_73 = arith.constant 0 : index
    %c0_74 = arith.constant 0 : index
    %90 = vector.load %arg2[%c0_73, %c0_74] : memref<128x128xbf16, #tpu.memory_space<vmem>>, vector<128x128xbf16>
    %cst = arith.constant dense<0.000000e+00> : vector<8x128xf32>
    %91 = tpu.matmul %89, %90, %cst {dimension_numbers = #tpu.dot_dimension_numbers<[1], [0], [0], [1], [0, 0, 1, 1], [], []>} : vector<8x128xbf16>, vector<128x128xbf16>, vector<8x128xf32> -> vector<8x128xf32>
    %c0_75 = arith.constant 0 : index
    %c0_76 = arith.constant 0 : index
    %92 = vector.load %arg3[%c0_75, %c0_76] : memref<1x128xf32, #tpu.memory_space<vmem>>, vector<1x128xf32>
    %93 = vector.broadcast %92 : vector<1x128xf32> to vector<8x128xf32>
    %94 = arith.addf %91, %93 : vector<8x128xf32>
    %cst_77 = arith.constant 3.000000e+01 : f32
    %95 = vector.broadcast %cst_77 : f32 to vector<8x128xf32>
    %96 = arith.minimumf %94, %95 : vector<8x128xf32>
    %97 = math.exp %96 : vector<8x128xf32>
    %cst_78 = arith.constant 1.000000e+00 : f32
    %98 = vector.broadcast %cst_78 : f32 to vector<8x128xf32>
    %99 = arith.addf %98, %97 : vector<8x128xf32>
    %100 = arith.mulf %99, %99 : vector<8x128xf32>
    %cst_79 = arith.constant 1.000000e+00 : f32
    %101 = vector.broadcast %cst_79 : f32 to vector<8x128xf32>
    %102 = arith.addf %100, %101 : vector<8x128xf32>
    %103 = tpu.reciprocal %102 {approx = true} : vector<8x128xf32> -> vector<8x128xf32>
    %cst_80 = arith.constant 2.000000e+00 : f32
    %104 = vector.broadcast %cst_80 : f32 to vector<8x128xf32>
    %105 = arith.mulf %104, %103 : vector<8x128xf32>
    %cst_81 = arith.constant 1.000000e+00 : f32
    %106 = vector.broadcast %cst_81 : f32 to vector<8x128xf32>
    %107 = arith.subf %106, %105 : vector<8x128xf32>
    %108 = arith.mulf %94, %107 : vector<8x128xf32>
    %109 = arith.truncf %108 : vector<8x128xf32> to vector<8x128xbf16>
    %c0_82 = arith.constant 0 : index
    %c0_83 = arith.constant 0 : index
    %110 = vector.load %arg4[%c0_82, %c0_83] : memref<128x128xbf16, #tpu.memory_space<vmem>>, vector<128x128xbf16>
    %cst_84 = arith.constant dense<0.000000e+00> : vector<8x128xf32>
    %111 = tpu.matmul %109, %110, %cst_84 {dimension_numbers = #tpu.dot_dimension_numbers<[1], [0], [0], [1], [0, 0, 1, 1], [], []>} : vector<8x128xbf16>, vector<128x128xbf16>, vector<8x128xf32> -> vector<8x128xf32>
    %c0_85 = arith.constant 0 : index
    %c0_86 = arith.constant 0 : index
    %112 = vector.load %arg5[%c0_85, %c0_86] : memref<1x128xf32, #tpu.memory_space<vmem>>, vector<1x128xf32>
    %113 = vector.broadcast %112 : vector<1x128xf32> to vector<8x128xf32>
    %114 = arith.addf %111, %113 : vector<8x128xf32>
    %c0_87 = arith.constant 0 : index
    %c0_88 = arith.constant 0 : index
    %115 = vector.load %arg6[%c0_87, %c0_88] : memref<8x128xf32, #tpu.memory_space<vmem>>, vector<8x128xf32>
    tpu.vector_store %arg6[%c0_87, %c0_88], %114 {strides = array<i32>} : memref<8x128xf32, #tpu.memory_space<vmem>>, vector<8x128xf32>,
    return
  }
}

</mosaic_0001>

<llo_original>
// kernel: tpu_custom_call.1
$region0: #{tpu_custom_call.1}
  #allocation0 [shape = 'u32[]', space=smem, size = 0x4, offset = 0x4, fixed_abs, tag = 'smem constant byte address 0x4 - core index']
  #allocation1 [shape = 'u32[144,128]{1,0:T(1,128)}', space=vmem, size = 0x12000, scoped, tag = 'internal scratch']
  #allocation2 [shape = 'f32[8,128]{1,0:T(8,128)}', space=vmem, size = 0x1000, scoped, tag = 'scratch operand']
  #allocation3 [shape = 's32[8]{0}', space=sflag, size = 0x20, scoped, tag = 'scratch operand']
  #allocation4 [shape = 's32[1]{0}', space=sflag, size = 0x4, scoped, tag = 'scoped memory for tpu_custom_call.1']
  #allocation5 [shape = 'u8[512]{0}', space=smem, size = 0x200, scoped, tag = 'prefetched SMEM operand 0']
  #allocation12 [shape = 's32[]', space=sflag, size = 0x4, offset = 0, fixed_abs, tag = 'sflag constant byte address 0x0 - dummy sync flag']
  #allocation13 [shape = 's32[]', space=sflag, size = 0x4, offset = 0, fixed_abs, tag = 'sflag constant byte address 0x0 - dummy sync flag']
  #allocation14 [shape = 'u32[]', space=smem, size = 0x4, offset = 0x44, fixed_abs, tag = 'smem constant byte address 0x44 - assertion arg 0']
  #allocation15 [shape = 'u32[]', space=smem, size = 0x4, offset = 0x48, fixed_abs, tag = 'smem constant byte address 0x48 - assertion arg 1']
  #allocation16 [shape = 's32[]', space=sflag, size = 0x4, offset = 0, fixed_abs, tag = 'sflag constant byte address 0x0 - dummy sync flag']
  #allocation17 [shape = 's32[]', space=sflag, size = 0x4, offset = 0, fixed_abs, tag = 'sflag constant byte address 0x0 - dummy sync flag']
  #allocation18 [shape = 's32[]', space=sflag, size = 0x4, offset = 0, fixed_abs, tag = 'sflag constant byte address 0x0 - dummy sync flag']
  #allocation19 [shape = 's32[]', space=sflag, size = 0x4, offset = 0, fixed_abs, tag = 'sflag constant byte address 0x0 - dummy sync flag']
  #allocation20 [shape = 's32[]', space=sflag, size = 0x4, offset = 0, fixed_abs, tag = 'sflag constant byte address 0x0 - dummy sync flag']
  #allocation21 [shape = 's32[]', space=sflag, size = 0x4, offset = 0, fixed_abs, tag = 'sflag constant byte address 0x0 - dummy sync flag']
  #allocation22 [shape = 's32[]', space=sflag, size = 0x4, offset = 0, fixed_abs, tag = 'sflag constant byte address 0x0 - dummy sync flag']
  #allocation23 [shape = 's32[]', space=sflag, size = 0x4, offset = 0, fixed_abs, tag = 'sflag constant byte address 0x0 - dummy sync flag']
  #allocation24 [shape = 's32[]', space=sflag, size = 0x4, offset = 0, fixed_abs, tag = 'sflag constant byte address 0x0 - dummy sync flag']
  #allocation25 [shape = 's32[]', space=sflag, size = 0x4, offset = 0, fixed_abs, tag = 'sflag constant byte address 0x0 - dummy sync flag']
  #allocation26 [shape = 's32[]', space=sflag, size = 0x4, offset = 0, fixed_abs, tag = 'sflag constant byte address 0x0 - dummy sync flag']
  #allocation27 [shape = 's32[]', space=sflag, size = 0x4, offset = 0, fixed_abs, tag = 'sflag constant byte address 0x0 - dummy sync flag']
  #allocation28 [shape = 's32[]', space=sflag, size = 0x4, offset = 0, fixed_abs, tag = 'sflag constant byte address 0x0 - dummy sync flag']
  #allocation29 [shape = 's32[]', space=sflag, size = 0x4, offset = 0, fixed_abs, tag = 'sflag constant byte address 0x0 - dummy sync flag']
  %s0 = inlined_call_operand.hbm [shape: s32[8], index: 0, kind: input, shape index: {}]
  %s1 = inlined_call_operand.hbm [shape: f32[1000,128], index: 1, kind: input, shape index: {}]
  %s2 = inlined_call_operand.hbm [shape: bf16[128,128], index: 2, kind: input, shape index: {}]
  %s3 = inlined_call_operand.vmem [shape: f32[1,128], index: 3, kind: input, shape index: {}]
  %s4 = inlined_call_operand.hbm [shape: bf16[128,128], index: 4, kind: input, shape index: {}]
  %s5 = inlined_call_operand.vmem [shape: f32[1,128], index: 5, kind: input, shape index: {}]
  %s6 = inlined_call_operand.hbm [shape: f32[8,128], index: 6, kind: output, shape index: {}]
  %s7 = sld [smem:[#allocation0]]
  $region66: #{tpu_custom_call.1} parent=0
    _
  %s9 = ssub.s32 1, %s7
  %s10 = scalar_select 0, %s9, %s7
  %12 = dma.hbm_to_smem %s0, 16, [#allocation5], [#allocation4]
  %13 = dma.done [#allocation4], 16
  %14 = sfence
  $region1: #{tpu_custom_call.1} parent=0
    #allocation6 [shape = 'u8[32768]{0}', space=vmem, size = 0x8000, scoped, tag = 'input window, operand 2, single buffered']
    #allocation7 [shape = 's32[1]{0}', space=sflag, size = 0x4, scoped, tag = 'scoped memory for tpu_custom_call.1']
    #allocation8 [shape = 's32[1]{0}', space=sflag, size = 0x4, scoped, tag = 'scoped memory for tpu_custom_call.1']
    #allocation9 [shape = 'u8[32768]{0}', space=vmem, size = 0x8000, scoped, tag = 'input window, operand 4, single buffered']
    #allocation10 [shape = 's32[1]{0}', space=sflag, size = 0x4, scoped, tag = 'scoped memory for tpu_custom_call.1']
    #allocation11 [shape = 'u8[4096]{0}', space=vmem, size = 0x1000, scoped, tag = 'output window, operand 0, single buffered']
    %15 = vsyncpa [#allocation7], 0
    %16 = vsyncpa [#allocation10], 0
    %17 = vsyncpa [#allocation8], 0
    // Predicated region
    $region2: #{tpu_custom_call.1} parent=1 // pred_check
      _
    $region3: #{tpu_custom_call.1} parent=1 // pred_check_branch
      %19 = sbr.rel (0) target = $region5
    $region4: #{tpu_custom_call.1} parent=1 // pred_region
      %s21 = ssub.s32 1024, 1024
      %22 = vsyncadd [#allocation7], %s21
      %s23 = sshll.u32 [#allocation6], 4
      %s24 = int_to_ptr.vmem [resolvable:$true] %s23
      %29 = dma.hbm_to_vmem [thread:$0]  %s2, 1024, %s24, [#allocation7], 64, 64, 4
    $region5: #{tpu_custom_call.1} parent=1 // pred_fallthru
      _
    // Predicated region
    $region6: #{tpu_custom_call.1} parent=1 // pred_check
      _
    $region7: #{tpu_custom_call.1} parent=1 // pred_check_branch
      %31 = sbr.rel (0) target = $region9
    $region8: #{tpu_custom_call.1} parent=1 // pred_region
      _
    $region9: #{tpu_custom_call.1} parent=1 // pred_fallthru
      _
    // Predicated region
    $region10: #{tpu_custom_call.1} parent=1 // pred_check
      _
    $region11: #{tpu_custom_call.1} parent=1 // pred_check_branch
      %33 = sbr.rel (0) target = $region13
    $region12: #{tpu_custom_call.1} parent=1 // pred_region
      %s35 = ssub.s32 1024, 1024
      %36 = vsyncadd [#allocation10], %s35
      %s37 = sshll.u32 [#allocation9], 4
      %s38 = int_to_ptr.vmem [resolvable:$true] %s37
      %43 = dma.hbm_to_vmem [thread:$0]  %s4, 1024, %s38, [#allocation10], 64, 64, 4
    $region13: #{tpu_custom_call.1} parent=1 // pred_fallthru
      _
    // Predicated region
    $region14: #{tpu_custom_call.1} parent=1 // pred_check
      _
    $region15: #{tpu_custom_call.1} parent=1 // pred_check_branch
      %45 = sbr.rel (0) target = $region17
    $region16: #{tpu_custom_call.1} parent=1 // pred_region
      _
    $region17: #{tpu_custom_call.1} parent=1 // pred_fallthru
      _
    // Predicated region
    $region18: #{tpu_custom_call.1} parent=1 // pred_check
      _
    $region19: #{tpu_custom_call.1} parent=1 // pred_check_branch
      %47 = sbr.rel (0) target = $region21
    $region20: #{tpu_custom_call.1} parent=1 // pred_region
      %48 = dma.done [#allocation7], 1024
    $region21: #{tpu_custom_call.1} parent=1 // pred_fallthru
      _
    // Predicated region
    $region22: #{tpu_custom_call.1} parent=1 // pred_check
      _
    $region23: #{tpu_custom_call.1} parent=1 // pred_check_branch
      %50 = sbr.rel (0) target = $region25
    $region24: #{tpu_custom_call.1} parent=1 // pred_region
      %51 = dma.done [#allocation10], 1024
    $region25: #{tpu_custom_call.1} parent=1 // pred_fallthru
      _
    %s53 = sld [smem:[#allocation5]]
    %p54 = scmp.gt.s32.totalorder %s53, 0
    %s55 = scalar_select %p54, %s53, 0
    %p56 = scmp.lt.s32.totalorder %s55, 999
    %s57 = scalar_select %p56, %s55, 999
    %s58 = smul.addr %s57, 16
    %s59 = scalar_lea.hbm %s1, %s58
    // Predicated region
    $region26: #{tpu_custom_call.1} parent=1 // pred_check
      _
    $region27: #{tpu_custom_call.1} parent=1 // pred_check_branch
      %61 = sbr.rel target = $region29
    $region28: #{tpu_custom_call.1} parent=1 // pred_region
      %62 = sst [smem:[#allocation14]] [#allocation13]
      %63 = sst [smem:[#allocation15]] [#allocation12]
    $region29: #{tpu_custom_call.1} parent=1 // pred_fallthru
      _
    %65 = shalt.err (0)
    %s67 = sshll.u32 [#allocation2], 4
    %s68 = int_to_ptr.vmem [resolvable:$true] %s67
    %70 = dma.hbm_to_vmem [thread:$0]  %s59, 16, %s68, [#allocation3]
    %s71 = sld [smem:[#allocation5 + $0x1]]
    %p72 = scmp.gt.s32.totalorder %s71, 0
    %s73 = scalar_select %p72, %s71, 0
    %p74 = scmp.lt.s32.totalorder %s73, 999
    %s75 = scalar_select %p74, %s73, 999
    %s76 = smul.addr %s75, 16
    %s77 = scalar_lea.hbm %s1, %s76
    %s78 = scalar_lea.vmem [#allocation2], 1
    %s79 = scalar_lea.sflag [#allocation3], 1
    // Predicated region
    $region30: #{tpu_custom_call.1} parent=1 // pred_check
      _
    $region31: #{tpu_custom_call.1} parent=1 // pred_check_branch
      %81 = sbr.rel target = $region33
    $region32: #{tpu_custom_call.1} parent=1 // pred_region
      %82 = sst [smem:[#allocation14]] [#allocation17]
      %83 = sst [smem:[#allocation15]] [#allocation16]
    $region33: #{tpu_custom_call.1} parent=1 // pred_fallthru
      _
    %85 = shalt.err (0)
    %s87 = sshll.u32 %s78, 4
    %s88 = int_to_ptr.vmem [resolvable:$true] %s87
    %90 = dma.hbm_to_vmem [thread:$0]  %s77, 16, %s88, %s79
    %s91 = sld [smem:[#allocation5 + $0x2]]
    %p92 = scmp.gt.s32.totalorder %s91, 0
    %s93 = scalar_select %p92, %s91, 0
    %p94 = scmp.lt.s32.totalorder %s93, 999
    %s95 = scalar_select %p94, %s93, 999
    %s96 = smul.addr %s95, 16
    %s97 = scalar_lea.hbm %s1, %s96
    %s98 = scalar_lea.vmem [#allocation2], 2
    %s99 = scalar_lea.sflag [#allocation3], 2
    // Predicated region
    $region34: #{tpu_custom_call.1} parent=1 // pred_check
      _
    $region35: #{tpu_custom_call.1} parent=1 // pred_check_branch
      %101 = sbr.rel target = $region37
    $region36: #{tpu_custom_call.1} parent=1 // pred_region
      %102 = sst [smem:[#allocation14]] [#allocation19]
      %103 = sst [smem:[#allocation15]] [#allocation18]
    $region37: #{tpu_custom_call.1} parent=1 // pred_fallthru
      _
    %105 = shalt.err (0)
    %s107 = sshll.u32 %s98, 4
    %s108 = int_to_ptr.vmem [resolvable:$true] %s107
    %110 = dma.hbm_to_vmem [thread:$0]  %s97, 16, %s108, %s99
    %s111 = sld [smem:[#allocation5 + $0x3]]
    %p112 = scmp.gt.s32.totalorder %s111, 0
    %s113 = scalar_select %p112, %s111, 0
    %p114 = scmp.lt.s32.totalorder %s113, 999
    %s115 = scalar_select %p114, %s113, 999
    %s116 = smul.addr %s115, 16
    %s117 = scalar_lea.hbm %s1, %s116
    %s118 = scalar_lea.vmem [#allocation2], 3
    %s119 = scalar_lea.sflag [#allocation3], 3
    // Predicated region
    $region38: #{tpu_custom_call.1} parent=1 // pred_check
      _
    $region39: #{tpu_custom_call.1} parent=1 // pred_check_branch
      %121 = sbr.rel target = $region41
    $region40: #{tpu_custom_call.1} parent=1 // pred_region
      %122 = sst [smem:[#allocation14]] [#allocation21]
      %123 = sst [smem:[#allocation15]] [#allocation20]
    $region41: #{tpu_custom_call.1} parent=1 // pred_fallthru
      _
    %125 = shalt.err (0)
    %s127 = sshll.u32 %s118, 4
    %s128 = int_to_ptr.vmem [resolvable:$true] %s127
    %130 = dma.hbm_to_vmem [thread:$0]  %s117, 16, %s128, %s119
    %s131 = sld [smem:[#allocation5 + $0x4]]
    %p132 = scmp.gt.s32.totalorder %s131, 0
    %s133 = scalar_select %p132, %s131, 0
    %p134 = scmp.lt.s32.totalorder %s133, 999
    %s135 = scalar_select %p134, %s133, 999
    %s136 = smul.addr %s135, 16
    %s137 = scalar_lea.hbm %s1, %s136
    %s138 = scalar_lea.vmem [#allocation2], 4
    %s139 = scalar_lea.sflag [#allocation3], 4
    // Predicated region
    $region42: #{tpu_custom_call.1} parent=1 // pred_check
      _
    $region43: #{tpu_custom_call.1} parent=1 // pred_check_branch
      %141 = sbr.rel target = $region45
    $region44: #{tpu_custom_call.1} parent=1 // pred_region
      %142 = sst [smem:[#allocation14]] [#allocation23]
      %143 = sst [smem:[#allocation15]] [#allocation22]
    $region45: #{tpu_custom_call.1} parent=1 // pred_fallthru
      _
    %145 = shalt.err (0)
    %s147 = sshll.u32 %s138, 4
    %s148 = int_to_ptr.vmem [resolvable:$true] %s147
    %150 = dma.hbm_to_vmem [thread:$0]  %s137, 16, %s148, %s139
    %s151 = sld [smem:[#allocation5 + $0x5]]
    %p152 = scmp.gt.s32.totalorder %s151, 0
    %s153 = scalar_select %p152, %s151, 0
    %p154 = scmp.lt.s32.totalorder %s153, 999
    %s155 = scalar_select %p154, %s153, 999
    %s156 = smul.addr %s155, 16
    %s157 = scalar_lea.hbm %s1, %s156
    %s158 = scalar_lea.vmem [#allocation2], 5
    %s159 = scalar_lea.sflag [#allocation3], 5
    // Predicated region
    $region46: #{tpu_custom_call.1} parent=1 // pred_check
      _
    $region47: #{tpu_custom_call.1} parent=1 // pred_check_branch
      %161 = sbr.rel target = $region49
    $region48: #{tpu_custom_call.1} parent=1 // pred_region
      %162 = sst [smem:[#allocation14]] [#allocation25]
      %163 = sst [smem:[#allocation15]] [#allocation24]
    $region49: #{tpu_custom_call.1} parent=1 // pred_fallthru
      _
    %165 = shalt.err (0)
    %s167 = sshll.u32 %s158, 4
    %s168 = int_to_ptr.vmem [resolvable:$true] %s167
    %170 = dma.hbm_to_vmem [thread:$0]  %s157, 16, %s168, %s159
    %s171 = sld [smem:[#allocation5 + $0x6]]
    %p172 = scmp.gt.s32.totalorder %s171, 0
    %s173 = scalar_select %p172, %s171, 0
    %p174 = scmp.lt.s32.totalorder %s173, 999
    %s175 = scalar_select %p174, %s173, 999
    %s176 = smul.addr %s175, 16
    %s177 = scalar_lea.hbm %s1, %s176
    %s178 = scalar_lea.vmem [#allocation2], 6
    %s179 = scalar_lea.sflag [#allocation3], 6
    // Predicated region
    $region50: #{tpu_custom_call.1} parent=1 // pred_check
      _
    $region51: #{tpu_custom_call.1} parent=1 // pred_check_branch
      %181 = sbr.rel target = $region53
    $region52: #{tpu_custom_call.1} parent=1 // pred_region
      %182 = sst [smem:[#allocation14]] [#allocation27]
      %183 = sst [smem:[#allocation15]] [#allocation26]
    $region53: #{tpu_custom_call.1} parent=1 // pred_fallthru
      _
    %185 = shalt.err (0)
    %s187 = sshll.u32 %s178, 4
    %s188 = int_to_ptr.vmem [resolvable:$true] %s187
    %190 = dma.hbm_to_vmem [thread:$0]  %s177, 16, %s188, %s179
    %s191 = sld [smem:[#allocation5 + $0x7]]
    %p192 = scmp.gt.s32.totalorder %s191, 0
    %s193 = scalar_select %p192, %s191, 0
    %p194 = scmp.lt.s32.totalorder %s193, 999
    %s195 = scalar_select %p194, %s193, 999
    %s196 = smul.addr %s195, 16
    %s197 = scalar_lea.hbm %s1, %s196
    %s198 = scalar_lea.vmem [#allocation2], 7
    %s199 = scalar_lea.sflag [#allocation3], 7
    // Predicated region
    $region54: #{tpu_custom_call.1} parent=1 // pred_check
      _
    $region55: #{tpu_custom_call.1} parent=1 // pred_check_branch
      %201 = sbr.rel target = $region57
    $region56: #{tpu_custom_call.1} parent=1 // pred_region
      %202 = sst [smem:[#allocation14]] [#allocation29]
      %203 = sst [smem:[#allocation15]] [#allocation28]
    $region57: #{tpu_custom_call.1} parent=1 // pred_fallthru
      _
    %205 = shalt.err (0)
    %s207 = sshll.u32 %s198, 4
    %s208 = int_to_ptr.vmem [resolvable:$true] %s207
    %210 = dma.hbm_to_vmem [thread:$0]  %s197, 16, %s208, %s199
    %s211 = smul.u32 1, 1
    %s212 = sshll.u32 %s211, 4
    %213 = dma.done [#allocation3], %s212
    %s214 = sshll.u32 %s211, 4
    %215 = dma.done %s79, %s214
    %s216 = sshll.u32 %s211, 4
    %217 = dma.done %s99, %s216
    %s218 = sshll.u32 %s211, 4
    %219 = dma.done %s119, %s218
    %s220 = sshll.u32 %s211, 4
    %221 = dma.done %s139, %s220
    %s222 = sshll.u32 %s211, 4
    %223 = dma.done %s159, %s222
    %s224 = sshll.u32 %s211, 4
    %225 = dma.done %s179, %s224
    %s226 = sshll.u32 %s211, 4
    %227 = dma.done %s199, %s226
    %v228 = vld [vmem:[#allocation2] sm:$0xff]
    %v229 = vpack.c.bf16 %v228, %v228
    %v230 = vld [vmem:[#allocation6] sm:$0xf]
    %v231 = vld [vmem:[#allocation6 + $0x4] sm:$0xf]
    %v232 = vld [vmem:[#allocation6 + $0x8] sm:$0xf]
    %v233 = vld [vmem:[#allocation6 + $0xc] sm:$0xf]
    %v234 = vld [vmem:[#allocation6 + $0x10] sm:$0xf]
    %v235 = vld [vmem:[#allocation6 + $0x14] sm:$0xf]
    %v236 = vld [vmem:[#allocation6 + $0x18] sm:$0xf]
    %v237 = vld [vmem:[#allocation6 + $0x1c] sm:$0xf]
    %v238 = vld [vmem:[#allocation6 + $0x20] sm:$0xf]
    %v239 = vld [vmem:[#allocation6 + $0x24] sm:$0xf]
    %v240 = vld [vmem:[#allocation6 + $0x28] sm:$0xf]
    %v241 = vld [vmem:[#allocation6 + $0x2c] sm:$0xf]
    %v242 = vld [vmem:[#allocation6 + $0x30] sm:$0xf]
    %v243 = vld [vmem:[#allocation6 + $0x34] sm:$0xf]
    %v244 = vld [vmem:[#allocation6 + $0x38] sm:$0xf]
    %v245 = vld [vmem:[#allocation6 + $0x3c] sm:$0xf]
    %v246 = vld [vmem:[%s3] sm:$0x1]
    %v248 = vlaneseq
    %v249 = vshrl.u32 %v248, 7
    %v250 = vsub.s32 0, %v249
    %v251 = vrot.slane %v246, %v250
    %v269 = vunpack.c.l.b16 %v230
    %v270 = vunpack.c.l.b16 %v231
    %v271 = vunpack.c.l.b16 %v232
    %v272 = vunpack.c.l.b16 %v233
    %v273 = vunpack.c.l.b16 %v234
    %v274 = vunpack.c.l.b16 %v235
    %v275 = vunpack.c.l.b16 %v236
    %v276 = vunpack.c.l.b16 %v237
    %v277 = vunpack.c.l.b16 %v238
    %v278 = vunpack.c.l.b16 %v239
    %v279 = vunpack.c.l.b16 %v240
    %v280 = vunpack.c.l.b16 %v241
    %v281 = vunpack.c.l.b16 %v242
    %v282 = vunpack.c.l.b16 %v243
    %v283 = vunpack.c.l.b16 %v244
    %v284 = vunpack.c.l.b16 %v245
    %v285 = vpack.c.b16 %v270, %v269
    %v286 = vpack.c.b16 %v272, %v271
    %v287 = vpack.c.b16 %v274, %v273
    %v288 = vpack.c.b16 %v276, %v275
    %v289 = vpack.c.b16 %v278, %v277
    %v290 = vpack.c.b16 %v280, %v279
    %v291 = vpack.c.b16 %v282, %v281
    %v292 = vpack.c.b16 %v284, %v283
    %301 = vmatprep.subr.bf16.mxu0 0
    %302 = vmatpush1.bf16.msra.mxu0 %v285
    %303 = vmatprep.subr.bf16.mxu0 0
    %304 = vmatpush1.bf16.msra.mxu0 %v286
    %305 = vmatprep.subr.bf16.mxu0 0
    %306 = vmatpush1.bf16.msra.mxu0 %v287
    %307 = vmatprep.subr.bf16.mxu0 0
    %308 = vmatpush1.bf16.msra.mxu0 %v288
    %309 = vmatprep.subr.bf16.mxu0 0
    %310 = vmatpush1.bf16.msra.mxu0 %v289
    %311 = vmatprep.subr.bf16.mxu0 0
    %312 = vmatpush1.bf16.msra.mxu0 %v290
    %313 = vmatprep.subr.bf16.mxu0 0
    %314 = vmatpush1.bf16.msra.mxu0 %v291
    %315 = vmatprep.subr.bf16.mxu0 0
    %316 = vmatpush1.bf16.msra.mxu0 %v292
    %317 = vmatprep.subr.bf16.mxu0 0
    %318 = vmatpush1.bf16.msra.mxu0 0
    %319 = vmatprep.subr.bf16.mxu0 0
    %320 = vmatpush1.bf16.msra.mxu0 0
    %321 = vmatprep.subr.bf16.mxu0 0
    %322 = vmatpush1.bf16.msra.mxu0 0
    %323 = vmatprep.subr.bf16.mxu0 0
    %324 = vmatpush1.bf16.msra.mxu0 0
    %325 = vmatprep.subr.bf16.mxu0 0
    %326 = vmatpush1.bf16.msra.mxu0 0
    %327 = vmatprep.subr.bf16.mxu0 0
    %328 = vmatpush1.bf16.msra.mxu0 0
    %329 = vmatprep.subr.bf16.mxu0 0
    %330 = vmatpush1.bf16.msra.mxu0 0
    %331 = vmatprep.subr.bf16.mxu0 0
    %332 = vmatpush1.bf16.msra.mxu0 0
    %333 = vmatprep.mubr.bf16.mxu0 0
    %334 = vmatmul.mubr.bf16.gmra.mrb[0].mxu0 %v229
    %v335 = vpop.f32.mrb[0].mxu0
    %v336 = vadd.f32 %v251, %v335
    %v337 = vpop.f32.mrb[0].mxu0
    %v338 = vpop.f32.mrb[0].mxu0
    %v339 = vpop.f32.mrb[0].mxu0
    %340 = vdwg.mxu0
    %v341 = vmin.f32 %v336, 30.0
    %v342 = vmul.f32 %v341, 1.442695
    %v343 = vpow.pop %v342
    %v344 = vadd.f32 %v343, 1.0
    %v345 = vmul.f32 %v344, %v344
    %v346 = vadd.f32 %v345, 1.0
    %v347 = vrcp.pop %v346
    %v348 = vmul.f32 %v347, 2.0
    %v349 = vsub.f32 1.0, %v348
    %v350 = vmul.f32 %v336, %v349
    %v351 = vpack.c.bf16 %v350, %v350
    %v352 = vld [vmem:[#allocation9] sm:$0xf]
    %v353 = vld [vmem:[#allocation9 + $0x4] sm:$0xf]
    %v354 = vld [vmem:[#allocation9 + $0x8] sm:$0xf]
    %v355 = vld [vmem:[#allocation9 + $0xc] sm:$0xf]
    %v356 = vld [vmem:[#allocation9 + $0x10] sm:$0xf]
    %v357 = vld [vmem:[#allocation9 + $0x14] sm:$0xf]
    %v358 = vld [vmem:[#allocation9 + $0x18] sm:$0xf]
    %v359 = vld [vmem:[#allocation9 + $0x1c] sm:$0xf]
    %v360 = vld [vmem:[#allocation9 + $0x20] sm:$0xf]
    %v361 = vld [vmem:[#allocation9 + $0x24] sm:$0xf]
    %v362 = vld [vmem:[#allocation9 + $0x28] sm:$0xf]
    %v363 = vld [vmem:[#allocation9 + $0x2c] sm:$0xf]
    %v364 = vld [vmem:[#allocation9 + $0x30] sm:$0xf]
    %v365 = vld [vmem:[#allocation9 + $0x34] sm:$0xf]
    %v366 = vld [vmem:[#allocation9 + $0x38] sm:$0xf]
    %v367 = vld [vmem:[#allocation9 + $0x3c] sm:$0xf]
    %v368 = vld [vmem:[%s5] sm:$0x1]
    %v370 = vlaneseq
    %v371 = vshrl.u32 %v370, 7
    %v372 = vsub.s32 0, %v371
    %v373 = vrot.slane %v368, %v372
    %v391 = vunpack.c.l.b16 %v352
    %v392 = vunpack.c.l.b16 %v353
    %v393 = vunpack.c.l.b16 %v354
    %v394 = vunpack.c.l.b16 %v355
    %v395 = vunpack.c.l.b16 %v356
    %v396 = vunpack.c.l.b16 %v357
    %v397 = vunpack.c.l.b16 %v358
    %v398 = vunpack.c.l.b16 %v359
    %v399 = vunpack.c.l.b16 %v360
    %v400 = vunpack.c.l.b16 %v361
    %v401 = vunpack.c.l.b16 %v362
    %v402 = vunpack.c.l.b16 %v363
    %v403 = vunpack.c.l.b16 %v364
    %v404 = vunpack.c.l.b16 %v365
    %v405 = vunpack.c.l.b16 %v366
    %v406 = vunpack.c.l.b16 %v367
    %v407 = vpack.c.b16 %v392, %v391
    %v408 = vpack.c.b16 %v394, %v393
    %v409 = vpack.c.b16 %v396, %v395
    %v410 = vpack.c.b16 %v398, %v397
    %v411 = vpack.c.b16 %v400, %v399
    %v412 = vpack.c.b16 %v402, %v401
    %v413 = vpack.c.b16 %v404, %v403
    %v414 = vpack.c.b16 %v406, %v405
    %423 = vmatprep.subr.bf16.mxu0 0
    %424 = vmatpush1.bf16.msra.mxu0 %v407
    %425 = vmatprep.subr.bf16.mxu0 0
    %426 = vmatpush1.bf16.msra.mxu0 %v408
    %427 = vmatprep.subr.bf16.mxu0 0
    %428 = vmatpush1.bf16.msra.mxu0 %v409
    %429 = vmatprep.subr.bf16.mxu0 0
    %430 = vmatpush1.bf16.msra.mxu0 %v410
    %431 = vmatprep.subr.bf16.mxu0 0
    %432 = vmatpush1.bf16.msra.mxu0 %v411
    %433 = vmatprep.subr.bf16.mxu0 0
    %434 = vmatpush1.bf16.msra.mxu0 %v412
    %435 = vmatprep.subr.bf16.mxu0 0
    %436 = vmatpush1.bf16.msra.mxu0 %v413
    %437 = vmatprep.subr.bf16.mxu0 0
    %438 = vmatpush1.bf16.msra.mxu0 %v414
    %439 = vmatprep.subr.bf16.mxu0 0
    %440 = vmatpush1.bf16.msra.mxu0 0
    %441 = vmatprep.subr.bf16.mxu0 0
    %442 = vmatpush1.bf16.msra.mxu0 0
    %443 = vmatprep.subr.bf16.mxu0 0
    %444 = vmatpush1.bf16.msra.mxu0 0
    %445 = vmatprep.subr.bf16.mxu0 0
    %446 = vmatpush1.bf16.msra.mxu0 0
    %447 = vmatprep.subr.bf16.mxu0 0
    %448 = vmatpush1.bf16.msra.mxu0 0
    %449 = vmatprep.subr.bf16.mxu0 0
    %450 = vmatpush1.bf16.msra.mxu0 0
    %451 = vmatprep.subr.bf16.mxu0 0
    %452 = vmatpush1.bf16.msra.mxu0 0
    %453 = vmatprep.subr.bf16.mxu0 0
    %454 = vmatpush1.bf16.msra.mxu0 0
    %455 = vmatprep.mubr.bf16.mxu0 0
    %456 = vmatmul.mubr.bf16.gmra.mrb[0].mxu0 %v351
    %v457 = vpop.f32.mrb[0].mxu0
    %v458 = vadd.f32 %v373, %v457
    %v459 = vpop.f32.mrb[0].mxu0
    %v460 = vpop.f32.mrb[0].mxu0
    %v461 = vpop.f32.mrb[0].mxu0
    %462 = vdwg.mxu0
    %463 = vst [vmem:[#allocation11] sm:$0xff] %v458
    // Predicated region
    $region58: #{tpu_custom_call.1} parent=1 // pred_check
      _
    $region59: #{tpu_custom_call.1} parent=1 // pred_check_branch
      %465 = sbr.rel (0) target = $region61
    $region60: #{tpu_custom_call.1} parent=1 // pred_region
      %s467 = ssub.s32 128, 128
      %468 = vsyncadd [#allocation8], %s467
      %s470 = sshll.u32 [#allocation11], 4
      %s471 = int_to_ptr.vmem [resolvable:$true] %s470
      %473 = dma.vmem_to_hbm [thread:$0]  %s471, 128, %s6, [#allocation8]
    $region61: #{tpu_custom_call.1} parent=1 // pred_fallthru
      _
    // Predicated region
    $region62: #{tpu_custom_call.1} parent=1 // pred_check
      _
    $region63: #{tpu_custom_call.1} parent=1 // pred_check_branch
      %475 = sbr.rel (0) target = $region65
    $region64: #{tpu_custom_call.1} parent=1 // pred_region
      %476 = dma.done [#allocation8], 128
    $region65: #{tpu_custom_call.1} parent=1 // pred_fallthru
      _
    %477 = vsyncpa [#allocation7], 1
    %478 = vsyncpa [#allocation10], 1
    %479 = vsyncpa [#allocation8], 1
  %480 = vsyncmov [#allocation3]
  %s481 = vpop.sfrf %480
  %p482 = scmp.eq.s32.totalorder %s481, 0
  %p483 = pneg %p482
  %485 = shalt.err (%p483)
  %s486 = scalar_lea.sflag [#allocation3], 1
  %487 = vsyncmov %s486
  %s488 = vpop.sfrf %487
  %p489 = scmp.eq.s32.totalorder %s488, 0
  %p490 = pneg %p489
  %492 = shalt.err (%p490)
  %s493 = scalar_lea.sflag [#allocation3], 2
  %494 = vsyncmov %s493
  %s495 = vpop.sfrf %494
  %p496 = scmp.eq.s32.totalorder %s495, 0
  %p497 = pneg %p496
  %499 = shalt.err (%p497)
  %s500 = scalar_lea.sflag [#allocation3], 3
  %501 = vsyncmov %s500
  %s502 = vpop.sfrf %501
  %p503 = scmp.eq.s32.totalorder %s502, 0
  %p504 = pneg %p503
  %506 = shalt.err (%p504)
  %s507 = scalar_lea.sflag [#allocation3], 4
  %508 = vsyncmov %s507
  %s509 = vpop.sfrf %508
  %p510 = scmp.eq.s32.totalorder %s509, 0
  %p511 = pneg %p510
  %513 = shalt.err (%p511)
  %s514 = scalar_lea.sflag [#allocation3], 5
  %515 = vsyncmov %s514
  %s516 = vpop.sfrf %515
  %p517 = scmp.eq.s32.totalorder %s516, 0
  %p518 = pneg %p517
  %520 = shalt.err (%p518)
  %s521 = scalar_lea.sflag [#allocation3], 6
  %522 = vsyncmov %s521
  %s523 = vpop.sfrf %522
  %p524 = scmp.eq.s32.totalorder %s523, 0
  %p525 = pneg %p524
  %527 = shalt.err (%p525)
  %s528 = scalar_lea.sflag [#allocation3], 7
  %529 = vsyncmov %s528
  %s530 = vpop.sfrf %529
  %p531 = scmp.eq.s32.totalorder %s530, 0
  %p532 = pneg %p531
  %534 = shalt.err (%p532)

</llo_original>
